<compile_context>
chip_gen: v6e
topology: v6e:2x2x1
jax: 0.10.0
libtpu: 0.0.40
codegen_flags: <defaults>
</compile_context>

<pallas_src>
import functools

import jax
import jax.numpy as jnp
import numpy as np
from jax.experimental import pallas as pl
from jax.experimental.pallas import tpu as pltpu

# ----- ACmix hyper-parameters (module __init__) -----
IN_PLANES = 8
OUT_PLANES = 8
HEAD = 4
HEAD_DIM = OUT_PLANES // HEAD            # 2
KERNEL_ATT = 7
KERNEL_CONV = 3
STRIDE = 1                               # stride=1 path of the forward
DILATION = 1
PAD_ATT = (DILATION * (KERNEL_ATT - 1) + 1) // 2   # 3


# ---------------------------------------------------------------------------
# pltpu.roll direction probe (one-time, cached).  We want out[i] = x[i + off];
# with jnp.roll-style semantics (out[i] = x[i - shift]) that is shift = -off.
# ---------------------------------------------------------------------------
_ROLL_LIKE_JNP = None


def _detect_roll_convention():
    global _ROLL_LIKE_JNP
    if _ROLL_LIKE_JNP is None:
        def probe(x_ref, o_ref):
            o_ref[...] = pltpu.roll(x_ref[...], 1, 1)

        x = jnp.tile(jnp.arange(128, dtype=jnp.float32)[None, :], (8, 1))
        y = pl.pallas_call(
            probe, out_shape=jax.ShapeDtypeStruct((8, 128), jnp.float32))(x)
        _ROLL_LIKE_JNP = bool(np.asarray(y)[0, 1] == 0.0)
    return _ROLL_LIKE_JNP


def _lane_roll(x, off, n):
    """result[..., i] = x[..., (i + off) % n]  via an XLU lane rotation."""
    shift = (-off) % n if _ROLL_LIKE_JNP else off % n
    if shift == 0:
        return x
    return pltpu.roll(x, shift, x.ndim - 1)


# ---------------------------------------------------------------------------
# Fused ACmix kernel: one matmul + 7x7 local attention + dep_conv shift taps + mix
# ---------------------------------------------------------------------------
def _acmix_kernel(x_ref, w_ref, b_ref, pet_ref, pets_ref, rmask_ref, rates_ref,
                  o_ref, mm_ref, sc_ref, *, pw, npl):
    C = OUT_PLANES
    KA2 = KERNEL_ATT * KERNEL_ATT          # 49
    KC2 = KERNEL_CONV * KERNEL_CONV        # 9

    # ---- single fused MXU matmul: [q*s ; k ; v ; swap(q*s) ; swap(k) ; conv rows] ----
    mm_ref[...] = (jnp.dot(w_ref[...], x_ref[...],
                           preferred_element_type=jnp.float32) + b_ref[...])

    pet = pet_ref[...]                              # pe (padded space), tiled per head
    pets = pets_ref[...]                            # pair-swapped pe
    qs = mm_ref[pl.ds(0 * C, C), :]                 # pre-scaled q
    kmp = mm_ref[pl.ds(1 * C, C), :] - pet          # folded (k_pad - pe_pad)
    vv = mm_ref[pl.ds(2 * C, C), :]
    qs_sw = mm_ref[pl.ds(3 * C, C), :]              # head_dim pair-swapped scaled q
    kmp_sw = mm_ref[pl.ds(4 * C, C), :] - pets      # pair-swapped (k_pad - pe_pad)

    # ---- conv branch: fc + group expansion already folded into the matmul; the fixed
    #      dep_conv shift kernels become 9 masked lane rotations (mask = zero padding) ----
    rmask = rmask_ref[...]
    conv = jnp.zeros((C, npl), jnp.float32)
    for j in range(KC2):
        off = (j // KERNEL_CONV - 1) * pw + (j % KERNEL_CONV - 1)
        f_j = mm_ref[pl.ds((5 + j) * C, C), :]
        conv = conv + _lane_roll(f_j * rmask, off, npl)

    # ---- attention branch: 7x7 local attention, 2-pass softmax ----
    s_qpe = qs * pet + qs_sw * pets                 # sum_d q*pe, duplicated per pair

    def att_off(j):
        return (j // KERNEL_ATT - PAD_ATT) * pw + (j % KERNEL_ATT - PAD_ATT)

    # pass 1: scores into VMEM scratch + running max
    m = None
    for j in range(KA2):
        off = att_off(j)
        s = (qs * _lane_roll(kmp, off, npl)
             + qs_sw * _lane_roll(kmp_sw, off, npl) + s_qpe)
        sc_ref[pl.ds(j * C, C), :] = s
        m = s if m is None else jnp.maximum(m, s)

    # pass 2: exp, normalizer and weighted-V accumulation
    l = jnp.zeros((C, npl), jnp.float32)
    acc = jnp.zeros((C, npl), jnp.float32)
    for j in range(KA2):
        p = jnp.exp(sc_ref[pl.ds(j * C, C), :] - m)
        l = l + p
        acc = acc + p * _lane_roll(vv, att_off(j), npl)
    out_att = acc * pl.reciprocal(l, approx=True)

    o_ref[...] = (rates_ref[0] * out_att + rates_ref[1] * conv).astype(o_ref.dtype)


# ---------------------------------------------------------------------------
# constants that only depend on H, W (built with numpy)
# ---------------------------------------------------------------------------
def _constants(H, W):
    P = PAD_ATT
    PH, PW = H + 2 * P, W + 2 * P
    NP = PH * PW
    NPL0 = ((NP + 127) // 128) * 128               # lane-pad to a multiple of 128
    loc_w = np.broadcast_to(np.linspace(-1.0, 1.0, W, dtype=np.float32)[None, :], (H, W))
    loc_h = np.broadcast_to(np.linspace(-1.0, 1.0, H, dtype=np.float32)[:, None], (H, W))
    loc = np.stack([loc_w, loc_h], 0)
    locpad = np.pad(loc, ((0, 0), (P, P), (P, P)), mode="reflect").reshape(2, NP)
    # real-position mask: 1 on the un-padded HxW positions, 0 on the reflect ring and
    # on the 484->512 lane padding.  Implements dep_conv's zero padding (masking the
    # source BEFORE the roll equals masking the shifted tap at the destination).
    yy, xx = np.meshgrid(np.arange(PH), np.arange(PW), indexing="ij")
    real = ((yy >= P) & (yy < P + H) & (xx >= P) & (xx < P + W)).reshape(NP)
    rmask = np.zeros((NPL0,), np.float32)
    rmask[:NP] = real.astype(np.float32)
    return locpad.astype(np.float32), rmask, PW, NP, NPL0


def _pick_batch_fold(B, max_fold=8):
    """Largest divisor Bb of B with B // Bb >= 2 (keep >= 2 'parallel' grid steps so
    both v7x TensorCores get work); each folded batch adds ~1.1 MB of VMEM scratch."""
    best = 1
    for bb in range(1, min(B, max_fold) + 1):
        if B % bb == 0 and B // bb >= 2:
            best = bb
    return best


# ---------------------------------------------------------------------------
# Full ACmix forward
# ---------------------------------------------------------------------------
def acmix_forward(x, params):
    _detect_roll_convention()
    B, Cin, H, W = x.shape
    C = OUT_PLANES
    P = PAD_ATT
    locpad_np, rmask_np, PW, NP, NPL0 = _constants(H, W)
    Bb = _pick_batch_fold(B)
    G = B // Bb
    NPL = Bb * NPL0
    scaling = float(HEAD_DIM) ** (-0.5)

    # --- tiny parameter-only prep (done once per call in XLA) ---
    perm = np.arange(C) ^ 1                                     # head_dim pair swap
    Wq, Wk, Wv = params["Wq"], params["Wk"], params["Wv"]
    bq, bk, bv = params["bq"], params["bk"], params["bv"]
    wall = jnp.concatenate([Wq, Wk, Wv], axis=0)                # (3C, Cin)
    ball = jnp.concatenate([bq, bk, bv])[:, None]               # (3C, 1)
    # fc weight embedded so that row (j*C + c) of (wfull @ [q;k;v]) = f_all[j, c // HEAD]
    jj, cc, tt, hh = np.meshgrid(np.arange(KERNEL_CONV ** 2), np.arange(C),
                                 np.arange(3), np.arange(HEAD), indexing="ij")
    rows = jj * C + cc
    cols = tt * C + hh * HEAD_DIM + (cc // HEAD)
    wfull = jnp.zeros((KERNEL_CONV ** 2 * C, 3 * C), jnp.float32)
    wfull = wfull.at[rows, cols].set(params["fcw"][jj, tt * HEAD + hh])
    # one combined projection: [q*s ; k ; v ; swap(q*s) ; swap(k) ; fc+group-expanded]
    wcombo = jnp.concatenate([Wq * scaling, Wk, Wv,
                              (Wq * scaling)[perm], Wk[perm],
                              wfull @ wall], axis=0)            # (14*C, Cin)
    bcombo = jnp.concatenate([(bq * scaling)[:, None], bk[:, None], bv[:, None],
                              (bq * scaling)[perm][:, None], bk[perm][:, None],
                              wfull @ ball], axis=0)            # (14*C, 1)

    # positional encoding on the reflection-padded grid (x-independent), lane-padded
    pepad = jnp.dot(params["Wp"], jnp.asarray(locpad_np)) + params["bp"][:, None]
    pepad = jnp.pad(pepad, ((0, 0), (0, NPL0 - NP)))            # (HEAD_DIM, NPL0)
    pet = jnp.tile(pepad, (HEAD, Bb))                           # row r -> pe[r % 2]
    pets = jnp.tile(pepad[::-1], (HEAD, Bb))                    # row r -> pe[(r+1) % 2]
    rmask = jnp.tile(jnp.asarray(rmask_np)[None, :], (C, Bb))   # (C, NPL)
    rates = params["rates"]

    # --- reflection-pad x once; fold Bb batch elements onto the lane axis.
    #     Rolls never leave a folded batch's NPL0-lane slot for any un-cropped output
    #     position, so the fold is exact. ---
    xpad = jnp.pad(x, ((0, 0), (0, 0), (P, P), (P, P)), mode="reflect")
    xpad = jnp.pad(xpad.reshape(B, Cin, NP), ((0, 0), (0, 0), (0, NPL0 - NP)))
    xfold = (xpad.reshape(G, Bb, Cin, NPL0).transpose(0, 2, 1, 3)
             .reshape(G, Cin, NPL))

    kern = functools.partial(_acmix_kernel, pw=PW, npl=NPL)
    out_f = pl.pallas_call(
        kern,
        out_shape=jax.ShapeDtypeStruct((G, C, NPL), jnp.float32),
        grid_spec=pltpu.PrefetchScalarGridSpec(
            num_scalar_prefetch=0,
            grid=(G,),
            in_specs=[
                pl.BlockSpec((None, Cin, NPL), lambda g: (g, 0, 0)),     # x (folded)
                pl.BlockSpec((14 * C, Cin), lambda g: (0, 0)),           # wcombo
                pl.BlockSpec((14 * C, 1), lambda g: (0, 0)),             # bcombo
                pl.BlockSpec((C, NPL), lambda g: (0, 0)),                # pe tiled
                pl.BlockSpec((C, NPL), lambda g: (0, 0)),                # pe swapped
                pl.BlockSpec((C, NPL), lambda g: (0, 0)),                # real mask
                pl.BlockSpec(memory_space=pltpu.MemorySpace.SMEM),       # rates (2,)
            ],
            out_specs=pl.BlockSpec((None, C, NPL), lambda g: (g, 0, 0)),
            scratch_shapes=[
                pltpu.VMEM((14 * C, NPL), jnp.float32),                  # fused matmul
                pltpu.VMEM((KERNEL_ATT ** 2 * C, NPL), jnp.float32),     # scores
            ],
        ),
        compiler_params=pltpu.CompilerParams(
            dimension_semantics=("parallel",)),
    )(xfold, wcombo, bcombo, pet, pets, rmask, rates)

    # unfold the batch, drop the lane padding, crop the reflect ring
    out = (out_f.reshape(G, C, Bb, NPL0).transpose(0, 2, 1, 3)
           .reshape(B, C, NPL0)[:, :, :NP]
           .reshape(B, C, H + 2 * P, W + 2 * P)[:, :, P:P + H, P:P + W])
    return out


# ---------------------------------------------------------------------------
# Pure-JAX reference (mirrors the PyTorch forward) for a correctness check
# ---------------------------------------------------------------------------
def acmix_reference(x, params):
    B, Cin, H, W = x.shape
    Cout = OUT_PLANES
    hp = "highest"
    q = jnp.einsum("oi,bihw->bohw", params["Wq"], x, precision=hp) \
        + params["bq"][None, :, None, None]
    k = jnp.einsum("oi,bihw->bohw", params["Wk"], x, precision=hp) \
        + params["bk"][None, :, None, None]
    v = jnp.einsum("oi,bihw->bohw", params["Wv"], x, precision=hp) \
        + params["bv"][None, :, None, None]

    loc_w = jnp.broadcast_to(jnp.linspace(-1.0, 1.0, W)[None, :], (H, W))
    loc_h = jnp.broadcast_to(jnp.linspace(-1.0, 1.0, H)[:, None], (H, W))
    loc = jnp.stack([loc_w, loc_h], axis=0)
    pe = jnp.einsum("di,ihw->dhw", params["Wp"], loc, precision=hp) \
        + params["bp"][:, None, None]

    scaling = float(HEAD_DIM) ** (-0.5)
    P, KA = PAD_ATT, KERNEL_ATT
    q5 = q.reshape(B * HEAD, HEAD_DIM, H, W) * scaling
    k5 = k.reshape(B * HEAD, HEAD_DIM, H, W)
    v5 = v.reshape(B * HEAD, HEAD_DIM, H, W)
    kpad = jnp.pad(k5, ((0, 0), (0, 0), (P, P), (P, P)), mode="reflect")
    vpad = jnp.pad(v5, ((0, 0), (0, 0), (P, P), (P, P)), mode="reflect")
    pepad = jnp.pad(pe, ((0, 0), (P, P), (P, P)), mode="reflect")

    offs = [(j // KA, j % KA) for j in range(KA * KA)]
    unf_k = jnp.stack([kpad[:, :, dy:dy + H, dx:dx + W] for dy, dx in offs], axis=2)
    unf_v = jnp.stack([vpad[:, :, dy:dy + H, dx:dx + W] for dy, dx in offs], axis=2)
    unf_pe = jnp.stack([pepad[:, dy:dy + H, dx:dx + W] for dy, dx in offs], axis=1)
    att = jnp.sum(q5[:, :, None] * (unf_k + pe[None, :, None] - unf_pe[None]), axis=1)
    att = jax.nn.softmax(att, axis=1)
    out_att = jnp.sum(att[:, None] * unf_v, axis=2).reshape(B, Cout, H, W)

    cat = jnp.concatenate([
        q.reshape(B, HEAD, HEAD_DIM, H * W),
        k.reshape(B, HEAD, HEAD_DIM, H * W),
        v.reshape(B, HEAD, HEAD_DIM, H * W)], axis=1)
    f_all = jnp.einsum("jm,bmds->bjds", params["fcw"], cat, precision=hp)
    f_conv = f_all.transpose(0, 2, 1, 3).reshape(B, HEAD_DIM * KERNEL_CONV ** 2, H, W)
    fpad = jnp.pad(f_conv, ((0, 0), (0, 0), (1, 1), (1, 1)))
    groups = []
    for g in range(HEAD_DIM):
        acc = jnp.zeros((B, H, W), jnp.float32)
        for j in range(KERNEL_CONV ** 2):
            dy, dx = j // KERNEL_CONV, j % KERNEL_CONV
            acc = acc + fpad[:, g * KERNEL_CONV ** 2 + j, dy:dy + H, dx:dx + W]
        groups.append(acc)
    oc = jnp.stack(groups, axis=1)                 # (B, HEAD_DIM, H, W)
    out_conv = jnp.repeat(oc, HEAD, axis=1)        # (B, Cout, H, W)
    return params["rates"][0] * out_att + params["rates"][1] * out_conv


if __name__ == "__main__":
    _detect_roll_convention()   # one-time eager probe, before any jit tracing

    key = jax.random.PRNGKey(0)
    keys = jax.random.split(key, 10)

    def rnd(k, shape, scale=0.1):
        return jax.random.normal(k, shape, jnp.float32) * scale

    # Deterministic parameter init (shapes from ACmix.__init__ / reset_parameters):
    #  - rate1 = rate2 = 0.5 (init_rate_half)
    #  - dep_conv weight is the fixed shift kernel (implemented as masked lane rolls
    #    inside the fused kernel); dep_conv bias is None after reset_parameters.
    params = dict(
        Wq=rnd(keys[0], (OUT_PLANES, IN_PLANES)), bq=rnd(keys[1], (OUT_PLANES,)),
        Wk=rnd(keys[2], (OUT_PLANES, IN_PLANES)), bk=rnd(keys[3], (OUT_PLANES,)),
        Wv=rnd(keys[4], (OUT_PLANES, IN_PLANES)), bv=rnd(keys[5], (OUT_PLANES,)),
        Wp=rnd(keys[6], (HEAD_DIM, 2)), bp=rnd(keys[7], (HEAD_DIM,)),
        fcw=rnd(keys[8], (KERNEL_CONV * KERNEL_CONV, 3 * HEAD)),
        rates=jnp.array([0.5, 0.5], jnp.float32),
    )

    x = jax.random.normal(keys[9], (2, IN_PLANES, 16, 16), jnp.float32)

    fwd = jax.jit(acmix_forward)
    out = jax.block_until_ready(fwd(x, params))

    ref = acmix_reference(x, params)
    np.testing.assert_allclose(np.asarray(out), np.asarray(ref),
                               rtol=1e-2, atol=1e-2)
    assert out.shape == (2, OUT_PLANES, 16, 16)
    print("KERNEL_OK")
</pallas_src>

<mosaic_0001>
module attributes {stable_mosaic.version = 11 : i64} {
  func.func @probe(%arg0: memref<8x128xf32, #tpu.memory_space<vmem>>, %arg1: memref<8x128xf32, #tpu.memory_space<vmem>>) attributes {dimension_semantics = [], scalar_prefetch = 0 : i64, scratch_operands = 0 : i64, tpu.core_type = #tpu.core_type<tc>} {
    %c0 = arith.constant 0 : index
    %c0_0 = arith.constant 0 : index
    %0 = vector.load %arg0[%c0, %c0_0] : memref<8x128xf32, #tpu.memory_space<vmem>>, vector<8x128xf32>
    %c1_i32 = arith.constant 1 : i32
    %1 = tpu.dynamic_rotate %0 by %c1_i32 dim 1 : vector<8x128xf32>, i32 -> vector<8x128xf32>
    %c0_1 = arith.constant 0 : index
    %c0_2 = arith.constant 0 : index
    %2 = vector.load %arg1[%c0_1, %c0_2] : memref<8x128xf32, #tpu.memory_space<vmem>>, vector<8x128xf32>
    tpu.vector_store %arg1[%c0_1, %c0_2], %1 {strides = array<i32>} : memref<8x128xf32, #tpu.memory_space<vmem>>, vector<8x128xf32>,
    return
  }
}

</mosaic_0001>

<llo_original>
// kernel: tpu_custom_call.1
$region0: #{tpu_custom_call.1}
  #allocation0 [shape = 'u32[]', space=smem, size = 0x4, offset = 0x4, fixed_abs, tag = 'smem constant byte address 0x4 - core index']
  #allocation1 [shape = 'u32[144,128]{1,0:T(1,128)}', space=vmem, size = 0x12000, scoped, tag = 'internal scratch']
  %s0 = inlined_call_operand.hbm [shape: f32[8,128], index: 0, kind: input, shape index: {}]
  %s1 = inlined_call_operand.hbm [shape: f32[8,128], index: 1, kind: output, shape index: {}]
  %s2 = sld [smem:[#allocation0]]
  $region18: #{tpu_custom_call.1} parent=0
    _
  %s4 = ssub.s32 1, %s2
  %s5 = scalar_select 0, %s4, %s2
  $region1: #{tpu_custom_call.1} parent=0
    #allocation2 [shape = 'u8[4096]{0}', space=vmem, size = 0x1000, scoped, tag = 'input window, operand 0, single buffered']
    #allocation3 [shape = 's32[1]{0}', space=sflag, size = 0x4, scoped, tag = 'scoped memory for tpu_custom_call.1']
    #allocation4 [shape = 's32[1]{0}', space=sflag, size = 0x4, scoped, tag = 'scoped memory for tpu_custom_call.1']
    #allocation5 [shape = 'u8[4096]{0}', space=vmem, size = 0x1000, scoped, tag = 'output window, operand 0, single buffered']
    %6 = vsyncpa [#allocation3], 0
    %7 = vsyncpa [#allocation4], 0
    // Predicated region
    $region2: #{tpu_custom_call.1} parent=1 // pred_check
      _
    $region3: #{tpu_custom_call.1} parent=1 // pred_check_branch
      %9 = sbr.rel (0) target = $region5
    $region4: #{tpu_custom_call.1} parent=1 // pred_region
      %s11 = ssub.s32 128, 128
      %12 = vsyncadd [#allocation3], %s11
      %s14 = sshll.u32 [#allocation2], 4
      %s15 = int_to_ptr.vmem [resolvable:$true] %s14
      %17 = dma.hbm_to_vmem [thread:$0]  %s0, 128, %s15, [#allocation3]
    $region5: #{tpu_custom_call.1} parent=1 // pred_fallthru
      _
    // Predicated region
    $region6: #{tpu_custom_call.1} parent=1 // pred_check
      _
    $region7: #{tpu_custom_call.1} parent=1 // pred_check_branch
      %19 = sbr.rel (0) target = $region9
    $region8: #{tpu_custom_call.1} parent=1 // pred_region
      %20 = dma.done [#allocation3], 128
    $region9: #{tpu_custom_call.1} parent=1 // pred_fallthru
      _
    %v21 = vld [vmem:[#allocation2] sm:$0xff]
    %22 = vrot.lane.b32.xlu0 %v21, 1
    %v23 = vpop.permute.xlu0 %22
    %24 = vst [vmem:[#allocation5] sm:$0xff] %v23
    // Predicated region
    $region10: #{tpu_custom_call.1} parent=1 // pred_check
      _
    $region11: #{tpu_custom_call.1} parent=1 // pred_check_branch
      %26 = sbr.rel (0) target = $region13
    $region12: #{tpu_custom_call.1} parent=1 // pred_region
      %s28 = ssub.s32 128, 128
      %29 = vsyncadd [#allocation4], %s28
      %s31 = sshll.u32 [#allocation5], 4
      %s32 = int_to_ptr.vmem [resolvable:$true] %s31
      %34 = dma.vmem_to_hbm [thread:$0]  %s32, 128, %s1, [#allocation4]
    $region13: #{tpu_custom_call.1} parent=1 // pred_fallthru
      _
    // Predicated region
    $region14: #{tpu_custom_call.1} parent=1 // pred_check
      _
    $region15: #{tpu_custom_call.1} parent=1 // pred_check_branch
      %36 = sbr.rel (0) target = $region17
    $region16: #{tpu_custom_call.1} parent=1 // pred_region
      %37 = dma.done [#allocation4], 128
    $region17: #{tpu_custom_call.1} parent=1 // pred_fallthru
      _
    %38 = vsyncpa [#allocation3], 1
    %39 = vsyncpa [#allocation4], 1

</llo_original>
